<compile_context>
chip_gen: v5e
topology: v5e:2x2
jax: 0.10.0
libtpu: 0.0.40
codegen_flags: <defaults>
</compile_context>

<pallas_src>
import jax
import jax.numpy as jnp
from jax.experimental import pallas as pl
from jax.experimental.pallas import tpu as pltpu


def binary_cnn_kernel(x_ref, wconv_ref, bconv_ref, wfc_ref, bfc_ref, out_ref):
    # x_ref:     (9, TILE_B) f32 VMEM  -- flattened 3x3 image rows, batch on lanes.
    # wconv_ref: (16,) f32 SMEM        -- conv weight, [c*4 + k] (row-major 2x2 kernel).
    # bconv_ref: (4,)  f32 SMEM        -- conv bias.
    # wfc_ref:   (4,)  f32 SMEM        -- fc weight (channel-major, matches x.view(B,-1)).
    # bfc_ref:   (1,)  f32 SMEM        -- fc bias.
    # out_ref:   (1, TILE_B) f32 VMEM  -- logits, batch on lanes.

    # Load the 9 image rows once; each is a lane-dense (1, TILE_B) slab.
    rows = [x_ref[r:r + 1, :] for r in range(9)]

    # In-kernel im2col: flat indices of the 2x2 window for each of the 4 conv output
    # positions (row-major), on the flattened 3x3 image.
    windows = []
    for i in range(2):
        for j in range(2):
            base = 3 * i + j
            windows.append((base, base + 1, base + 3, base + 4))

    acc = None
    for c in range(4):  # 4 output channels
        pooled_c = None
        for idxs in windows:  # 4 conv positions == the single MaxPool2d(2) window
            dot = None
            for k, r in enumerate(idxs):  # K = 4 contraction on the VPU
                term = wconv_ref[c * 4 + k] * rows[r]
                dot = term if dot is None else dot + term
            pooled_c = dot if pooled_c is None else jnp.maximum(pooled_c, dot)
        # Bias + ReLU hoisted out of the position loop:
        #   max_p ReLU(dot_p + b) == ReLU(max_p(dot_p) + b)   (b identical across p,
        #   ReLU monotone) -- 1 broadcast-add + 1 ReLU per channel instead of 4.
        pooled_c = jnp.maximum(pooled_c + bconv_ref[c], 0.0)
        # Fully connected head folded into the same channel loop.
        fc_term = wfc_ref[c] * pooled_c
        acc = fc_term if acc is None else acc + fc_term

    out_ref[...] = acc + bfc_ref[0]


def binary_cnn_forward(x, w_conv, b_conv, w_fc, b_fc, *, tile_b=512):
    """x: (B, 1, 3, 3) NCHW float32. Returns (B, 1) float32 logits."""
    B = x.shape[0]

    # Lane-dense layout: flatten each image to 9 values, put batch on the lane axis.
    x_rows = x.reshape(B, 9).T.astype(jnp.float32)  # (9, B)

    # Pick a lane tile (multiple of 128) and pad the batch up to it.
    b_tile = min(tile_b, ((B + 127) // 128) * 128)
    b_pad = ((B + b_tile - 1) // b_tile) * b_tile
    if b_pad != B:
        x_rows = jnp.pad(x_rows, ((0, 0), (0, b_pad - B)))

    # Parameter glue: PyTorch conv weight (C_out, C_in, kH, kW) -> per-channel
    # row-major flattened kernel, same order as the in-kernel window indices.
    wconv_flat = w_conv.reshape(4, 4).reshape(-1).astype(jnp.float32)  # (16,)
    bconv_flat = b_conv.reshape(4).astype(jnp.float32)                 # (4,)
    wfc_flat = w_fc.reshape(4).astype(jnp.float32)                     # (4,)
    bfc_flat = b_fc.reshape(1).astype(jnp.float32)                     # (1,)

    smem_spec = pl.BlockSpec(memory_space=pltpu.MemorySpace.SMEM)
    grid = (b_pad // b_tile,)

    out = pl.pallas_call(
        binary_cnn_kernel,
        out_shape=jax.ShapeDtypeStruct((1, b_pad), jnp.float32),
        grid=grid,
        in_specs=[
            pl.BlockSpec((9, b_tile), lambda i: (0, i)),  # x rows, batch tiled on lanes
            smem_spec,  # conv weight (scalars)
            smem_spec,  # conv bias
            smem_spec,  # fc weight
            smem_spec,  # fc bias
        ],
        out_specs=pl.BlockSpec((1, b_tile), lambda i: (0, i)),  # lane-dense output
        compiler_params=pltpu.CompilerParams(
            dimension_semantics=("parallel",),
        ),
    )(x_rows, wconv_flat, bconv_flat, wfc_flat, bfc_flat)

    # Wrapper-side reshape back to PyTorch's (B, 1).
    return out[0, :B].reshape(B, 1)


def _reference(x, w_conv, b_conv, w_fc, b_fc):
    """Pure-JAX reference matching PyTorch BinaryCNN.forward semantics."""
    conv = jax.lax.conv_general_dilated(
        x, w_conv, window_strides=(1, 1), padding="VALID",
        dimension_numbers=("NCHW", "OIHW", "NCHW"),
    ) + b_conv[None, :, None, None]
    relu = jnp.maximum(conv, 0.0)
    pooled = jax.lax.reduce_window(
        relu, -jnp.inf, jax.lax.max, (1, 1, 2, 2), (1, 1, 2, 2), "VALID"
    )
    flat = pooled.reshape(x.shape[0], -1)  # (B, 4) channel-major, like x.view(B, -1)
    return flat @ w_fc.T + b_fc


if __name__ == "__main__":
    key = jax.random.PRNGKey(0)
    kx, kw1, kb1, kw2, kb2 = jax.random.split(key, 5)

    # Deterministic synthetic parameters (shapes match the PyTorch module).
    w_conv = jax.random.normal(kw1, (4, 1, 2, 2), dtype=jnp.float32) * 0.5
    b_conv = jax.random.normal(kb1, (4,), dtype=jnp.float32) * 0.1
    w_fc = jax.random.normal(kw2, (1, 4), dtype=jnp.float32) * 0.5
    b_fc = jax.random.normal(kb2, (1,), dtype=jnp.float32) * 0.1

    # Input spatial 3x3 so that conv(k=2) -> 2x2 and maxpool(2) -> 1x1,
    # matching nn.Linear(4 * 1 * 1, 1).  Primary small-batch check (B=2).
    B = 2
    x = jax.random.normal(kx, (B, 1, 3, 3), dtype=jnp.float32)

    out = binary_cnn_forward(x, w_conv, b_conv, w_fc, b_fc)
    out = jax.block_until_ready(out)
    ref = _reference(x, w_conv, b_conv, w_fc, b_fc)
    assert out.shape == (B, 1), out.shape
    assert jnp.allclose(out, ref, atol=1e-5, rtol=1e-5), (out, ref)

    # Second check: batch not a multiple of the lane tile and grid > 1
    # (exercises padding + batch tiling + "parallel" grid axis).
    B2 = 600
    x2 = jax.random.normal(kx, (B2, 1, 3, 3), dtype=jnp.float32)
    out2 = jax.block_until_ready(binary_cnn_forward(x2, w_conv, b_conv, w_fc, b_fc))
    ref2 = _reference(x2, w_conv, b_conv, w_fc, b_fc)
    assert out2.shape == (B2, 1), out2.shape
    assert jnp.allclose(out2, ref2, atol=1e-5, rtol=1e-5)

    print("KERNEL_OK")
</pallas_src>

<mosaic_0001>
module attributes {stable_mosaic.version = 11 : i64} {
  func.func @binary_cnn_kernel(%arg0: i32, %arg1: memref<9x128xf32, #tpu.memory_space<vmem>>, %arg2: memref<16xf32, #tpu.memory_space<smem>>, %arg3: memref<4xf32, #tpu.memory_space<smem>>, %arg4: memref<4xf32, #tpu.memory_space<smem>>, %arg5: memref<1xf32, #tpu.memory_space<smem>>, %arg6: memref<1x128xf32, #tpu.memory_space<vmem>>) attributes {dimension_semantics = [#tpu.dimension_semantics<parallel>], iteration_bounds = array<i64: 1>, scalar_prefetch = 0 : i64, scratch_operands = 0 : i64, tpu.core_type = #tpu.core_type<tc>, window_params = [{transform_indices = @transform_0, window_bounds = array<i64: 9, 128>}, {transform_indices = @transform_1, window_bounds = array<i64: 16>}, {transform_indices = @transform_2, window_bounds = array<i64: 4>}, {transform_indices = @transform_3, window_bounds = array<i64: 4>}, {transform_indices = @transform_4, window_bounds = array<i64: 1>}, {transform_indices = @transform_5, window_bounds = array<i64: 1, 128>}]} {
    %c0 = arith.constant 0 : index
    %c0_0 = arith.constant 0 : index
    %0 = vector.load %arg1[%c0, %c0_0] : memref<9x128xf32, #tpu.memory_space<vmem>>, vector<1x128xf32>
    %c1 = arith.constant 1 : index
    %c0_1 = arith.constant 0 : index
    %1 = vector.load %arg1[%c1, %c0_1] : memref<9x128xf32, #tpu.memory_space<vmem>>, vector<1x128xf32>
    %c2 = arith.constant 2 : index
    %c0_2 = arith.constant 0 : index
    %2 = vector.load %arg1[%c2, %c0_2] : memref<9x128xf32, #tpu.memory_space<vmem>>, vector<1x128xf32>
    %c3 = arith.constant 3 : index
    %c0_3 = arith.constant 0 : index
    %3 = vector.load %arg1[%c3, %c0_3] : memref<9x128xf32, #tpu.memory_space<vmem>>, vector<1x128xf32>
    %c4 = arith.constant 4 : index
    %c0_4 = arith.constant 0 : index
    %4 = vector.load %arg1[%c4, %c0_4] : memref<9x128xf32, #tpu.memory_space<vmem>>, vector<1x128xf32>
    %c5 = arith.constant 5 : index
    %c0_5 = arith.constant 0 : index
    %5 = vector.load %arg1[%c5, %c0_5] : memref<9x128xf32, #tpu.memory_space<vmem>>, vector<1x128xf32>
    %c6 = arith.constant 6 : index
    %c0_6 = arith.constant 0 : index
    %6 = vector.load %arg1[%c6, %c0_6] : memref<9x128xf32, #tpu.memory_space<vmem>>, vector<1x128xf32>
    %c7 = arith.constant 7 : index
    %c0_7 = arith.constant 0 : index
    %7 = vector.load %arg1[%c7, %c0_7] : memref<9x128xf32, #tpu.memory_space<vmem>>, vector<1x128xf32>
    %c8 = arith.constant 8 : index
    %c0_8 = arith.constant 0 : index
    %8 = vector.load %arg1[%c8, %c0_8] : memref<9x128xf32, #tpu.memory_space<vmem>>, vector<1x128xf32>
    %c0_9 = arith.constant 0 : index
    %9 = memref.load %arg2[%c0_9] : memref<16xf32, #tpu.memory_space<smem>>
    %10 = vector.broadcast %9 : f32 to vector<1x128xf32>
    %11 = arith.mulf %10, %0 : vector<1x128xf32>
    %c1_10 = arith.constant 1 : index
    %12 = memref.load %arg2[%c1_10] : memref<16xf32, #tpu.memory_space<smem>>
    %13 = vector.broadcast %12 : f32 to vector<1x128xf32>
    %14 = arith.mulf %13, %1 : vector<1x128xf32>
    %15 = arith.addf %11, %14 : vector<1x128xf32>
    %c2_11 = arith.constant 2 : index
    %16 = memref.load %arg2[%c2_11] : memref<16xf32, #tpu.memory_space<smem>>
    %17 = vector.broadcast %16 : f32 to vector<1x128xf32>
    %18 = arith.mulf %17, %3 : vector<1x128xf32>
    %19 = arith.addf %15, %18 : vector<1x128xf32>
    %c3_12 = arith.constant 3 : index
    %20 = memref.load %arg2[%c3_12] : memref<16xf32, #tpu.memory_space<smem>>
    %21 = vector.broadcast %20 : f32 to vector<1x128xf32>
    %22 = arith.mulf %21, %4 : vector<1x128xf32>
    %23 = arith.addf %19, %22 : vector<1x128xf32>
    %c0_13 = arith.constant 0 : index
    %24 = memref.load %arg2[%c0_13] : memref<16xf32, #tpu.memory_space<smem>>
    %25 = vector.broadcast %24 : f32 to vector<1x128xf32>
    %26 = arith.mulf %25, %1 : vector<1x128xf32>
    %c1_14 = arith.constant 1 : index
    %27 = memref.load %arg2[%c1_14] : memref<16xf32, #tpu.memory_space<smem>>
    %28 = vector.broadcast %27 : f32 to vector<1x128xf32>
    %29 = arith.mulf %28, %2 : vector<1x128xf32>
    %30 = arith.addf %26, %29 : vector<1x128xf32>
    %c2_15 = arith.constant 2 : index
    %31 = memref.load %arg2[%c2_15] : memref<16xf32, #tpu.memory_space<smem>>
    %32 = vector.broadcast %31 : f32 to vector<1x128xf32>
    %33 = arith.mulf %32, %4 : vector<1x128xf32>
    %34 = arith.addf %30, %33 : vector<1x128xf32>
    %c3_16 = arith.constant 3 : index
    %35 = memref.load %arg2[%c3_16] : memref<16xf32, #tpu.memory_space<smem>>
    %36 = vector.broadcast %35 : f32 to vector<1x128xf32>
    %37 = arith.mulf %36, %5 : vector<1x128xf32>
    %38 = arith.addf %34, %37 : vector<1x128xf32>
    %39 = arith.maximumf %23, %38 : vector<1x128xf32>
    %c0_17 = arith.constant 0 : index
    %40 = memref.load %arg2[%c0_17] : memref<16xf32, #tpu.memory_space<smem>>
    %41 = vector.broadcast %40 : f32 to vector<1x128xf32>
    %42 = arith.mulf %41, %3 : vector<1x128xf32>
    %c1_18 = arith.constant 1 : index
    %43 = memref.load %arg2[%c1_18] : memref<16xf32, #tpu.memory_space<smem>>
    %44 = vector.broadcast %43 : f32 to vector<1x128xf32>
    %45 = arith.mulf %44, %4 : vector<1x128xf32>
    %46 = arith.addf %42, %45 : vector<1x128xf32>
    %c2_19 = arith.constant 2 : index
    %47 = memref.load %arg2[%c2_19] : memref<16xf32, #tpu.memory_space<smem>>
    %48 = vector.broadcast %47 : f32 to vector<1x128xf32>
    %49 = arith.mulf %48, %6 : vector<1x128xf32>
    %50 = arith.addf %46, %49 : vector<1x128xf32>
    %c3_20 = arith.constant 3 : index
    %51 = memref.load %arg2[%c3_20] : memref<16xf32, #tpu.memory_space<smem>>
    %52 = vector.broadcast %51 : f32 to vector<1x128xf32>
    %53 = arith.mulf %52, %7 : vector<1x128xf32>
    %54 = arith.addf %50, %53 : vector<1x128xf32>
    %55 = arith.maximumf %39, %54 : vector<1x128xf32>
    %c0_21 = arith.constant 0 : index
    %56 = memref.load %arg2[%c0_21] : memref<16xf32, #tpu.memory_space<smem>>
    %57 = vector.broadcast %56 : f32 to vector<1x128xf32>
    %58 = arith.mulf %57, %4 : vector<1x128xf32>
    %c1_22 = arith.constant 1 : index
    %59 = memref.load %arg2[%c1_22] : memref<16xf32, #tpu.memory_space<smem>>
    %60 = vector.broadcast %59 : f32 to vector<1x128xf32>
    %61 = arith.mulf %60, %5 : vector<1x128xf32>
    %62 = arith.addf %58, %61 : vector<1x128xf32>
    %c2_23 = arith.constant 2 : index
    %63 = memref.load %arg2[%c2_23] : memref<16xf32, #tpu.memory_space<smem>>
    %64 = vector.broadcast %63 : f32 to vector<1x128xf32>
    %65 = arith.mulf %64, %7 : vector<1x128xf32>
    %66 = arith.addf %62, %65 : vector<1x128xf32>
    %c3_24 = arith.constant 3 : index
    %67 = memref.load %arg2[%c3_24] : memref<16xf32, #tpu.memory_space<smem>>
    %68 = vector.broadcast %67 : f32 to vector<1x128xf32>
    %69 = arith.mulf %68, %8 : vector<1x128xf32>
    %70 = arith.addf %66, %69 : vector<1x128xf32>
    %71 = arith.maximumf %55, %70 : vector<1x128xf32>
    %c0_25 = arith.constant 0 : index
    %72 = memref.load %arg3[%c0_25] : memref<4xf32, #tpu.memory_space<smem>>
    %73 = vector.broadcast %72 : f32 to vector<1x128xf32>
    %74 = arith.addf %71, %73 : vector<1x128xf32>
    %cst = arith.constant 0.000000e+00 : f32
    %75 = vector.broadcast %cst : f32 to vector<1x128xf32>
    %76 = arith.maximumf %74, %75 : vector<1x128xf32>
    %c0_26 = arith.constant 0 : index
    %77 = memref.load %arg4[%c0_26] : memref<4xf32, #tpu.memory_space<smem>>
    %78 = vector.broadcast %77 : f32 to vector<1x128xf32>
    %79 = arith.mulf %78, %76 : vector<1x128xf32>
    %c4_27 = arith.constant 4 : index
    %80 = memref.load %arg2[%c4_27] : memref<16xf32, #tpu.memory_space<smem>>
    %81 = vector.broadcast %80 : f32 to vector<1x128xf32>
    %82 = arith.mulf %81, %0 : vector<1x128xf32>
    %c5_28 = arith.constant 5 : index
    %83 = memref.load %arg2[%c5_28] : memref<16xf32, #tpu.memory_space<smem>>
    %84 = vector.broadcast %83 : f32 to vector<1x128xf32>
    %85 = arith.mulf %84, %1 : vector<1x128xf32>
    %86 = arith.addf %82, %85 : vector<1x128xf32>
    %c6_29 = arith.constant 6 : index
    %87 = memref.load %arg2[%c6_29] : memref<16xf32, #tpu.memory_space<smem>>
    %88 = vector.broadcast %87 : f32 to vector<1x128xf32>
    %89 = arith.mulf %88, %3 : vector<1x128xf32>
    %90 = arith.addf %86, %89 : vector<1x128xf32>
    %c7_30 = arith.constant 7 : index
    %91 = memref.load %arg2[%c7_30] : memref<16xf32, #tpu.memory_space<smem>>
    %92 = vector.broadcast %91 : f32 to vector<1x128xf32>
    %93 = arith.mulf %92, %4 : vector<1x128xf32>
    %94 = arith.addf %90, %93 : vector<1x128xf32>
    %c4_31 = arith.constant 4 : index
    %95 = memref.load %arg2[%c4_31] : memref<16xf32, #tpu.memory_space<smem>>
    %96 = vector.broadcast %95 : f32 to vector<1x128xf32>
    %97 = arith.mulf %96, %1 : vector<1x128xf32>
    %c5_32 = arith.constant 5 : index
    %98 = memref.load %arg2[%c5_32] : memref<16xf32, #tpu.memory_space<smem>>
    %99 = vector.broadcast %98 : f32 to vector<1x128xf32>
    %100 = arith.mulf %99, %2 : vector<1x128xf32>
    %101 = arith.addf %97, %100 : vector<1x128xf32>
    %c6_33 = arith.constant 6 : index
    %102 = memref.load %arg2[%c6_33] : memref<16xf32, #tpu.memory_space<smem>>
    %103 = vector.broadcast %102 : f32 to vector<1x128xf32>
    %104 = arith.mulf %103, %4 : vector<1x128xf32>
    %105 = arith.addf %101, %104 : vector<1x128xf32>
    %c7_34 = arith.constant 7 : index
    %106 = memref.load %arg2[%c7_34] : memref<16xf32, #tpu.memory_space<smem>>
    %107 = vector.broadcast %106 : f32 to vector<1x128xf32>
    %108 = arith.mulf %107, %5 : vector<1x128xf32>
    %109 = arith.addf %105, %108 : vector<1x128xf32>
    %110 = arith.maximumf %94, %109 : vector<1x128xf32>
    %c4_35 = arith.constant 4 : index
    %111 = memref.load %arg2[%c4_35] : memref<16xf32, #tpu.memory_space<smem>>
    %112 = vector.broadcast %111 : f32 to vector<1x128xf32>
    %113 = arith.mulf %112, %3 : vector<1x128xf32>
    %c5_36 = arith.constant 5 : index
    %114 = memref.load %arg2[%c5_36] : memref<16xf32, #tpu.memory_space<smem>>
    %115 = vector.broadcast %114 : f32 to vector<1x128xf32>
    %116 = arith.mulf %115, %4 : vector<1x128xf32>
    %117 = arith.addf %113, %116 : vector<1x128xf32>
    %c6_37 = arith.constant 6 : index
    %118 = memref.load %arg2[%c6_37] : memref<16xf32, #tpu.memory_space<smem>>
    %119 = vector.broadcast %118 : f32 to vector<1x128xf32>
    %120 = arith.mulf %119, %6 : vector<1x128xf32>
    %121 = arith.addf %117, %120 : vector<1x128xf32>
    %c7_38 = arith.constant 7 : index
    %122 = memref.load %arg2[%c7_38] : memref<16xf32, #tpu.memory_space<smem>>
    %123 = vector.broadcast %122 : f32 to vector<1x128xf32>
    %124 = arith.mulf %123, %7 : vector<1x128xf32>
    %125 = arith.addf %121, %124 : vector<1x128xf32>
    %126 = arith.maximumf %110, %125 : vector<1x128xf32>
    %c4_39 = arith.constant 4 : index
    %127 = memref.load %arg2[%c4_39] : memref<16xf32, #tpu.memory_space<smem>>
    %128 = vector.broadcast %127 : f32 to vector<1x128xf32>
    %129 = arith.mulf %128, %4 : vector<1x128xf32>
    %c5_40 = arith.constant 5 : index
    %130 = memref.load %arg2[%c5_40] : memref<16xf32, #tpu.memory_space<smem>>
    %131 = vector.broadcast %130 : f32 to vector<1x128xf32>
    %132 = arith.mulf %131, %5 : vector<1x128xf32>
    %133 = arith.addf %129, %132 : vector<1x128xf32>
    %c6_41 = arith.constant 6 : index
    %134 = memref.load %arg2[%c6_41] : memref<16xf32, #tpu.memory_space<smem>>
    %135 = vector.broadcast %134 : f32 to vector<1x128xf32>
    %136 = arith.mulf %135, %7 : vector<1x128xf32>
    %137 = arith.addf %133, %136 : vector<1x128xf32>
    %c7_42 = arith.constant 7 : index
    %138 = memref.load %arg2[%c7_42] : memref<16xf32, #tpu.memory_space<smem>>
    %139 = vector.broadcast %138 : f32 to vector<1x128xf32>
    %140 = arith.mulf %139, %8 : vector<1x128xf32>
    %141 = arith.addf %137, %140 : vector<1x128xf32>
    %142 = arith.maximumf %126, %141 : vector<1x128xf32>
    %c1_43 = arith.constant 1 : index
    %143 = memref.load %arg3[%c1_43] : memref<4xf32, #tpu.memory_space<smem>>
    %144 = vector.broadcast %143 : f32 to vector<1x128xf32>
    %145 = arith.addf %142, %144 : vector<1x128xf32>
    %cst_44 = arith.constant 0.000000e+00 : f32
    %146 = vector.broadcast %cst_44 : f32 to vector<1x128xf32>
    %147 = arith.maximumf %145, %146 : vector<1x128xf32>
    %c1_45 = arith.constant 1 : index
    %148 = memref.load %arg4[%c1_45] : memref<4xf32, #tpu.memory_space<smem>>
    %149 = vector.broadcast %148 : f32 to vector<1x128xf32>
    %150 = arith.mulf %149, %147 : vector<1x128xf32>
    %151 = arith.addf %79, %150 : vector<1x128xf32>
    %c8_46 = arith.constant 8 : index
    %152 = memref.load %arg2[%c8_46] : memref<16xf32, #tpu.memory_space<smem>>
    %153 = vector.broadcast %152 : f32 to vector<1x128xf32>
    %154 = arith.mulf %153, %0 : vector<1x128xf32>
    %c9 = arith.constant 9 : index
    %155 = memref.load %arg2[%c9] : memref<16xf32, #tpu.memory_space<smem>>
    %156 = vector.broadcast %155 : f32 to vector<1x128xf32>
    %157 = arith.mulf %156, %1 : vector<1x128xf32>
    %158 = arith.addf %154, %157 : vector<1x128xf32>
    %c10 = arith.constant 10 : index
    %159 = memref.load %arg2[%c10] : memref<16xf32, #tpu.memory_space<smem>>
    %160 = vector.broadcast %159 : f32 to vector<1x128xf32>
    %161 = arith.mulf %160, %3 : vector<1x128xf32>
    %162 = arith.addf %158, %161 : vector<1x128xf32>
    %c11 = arith.constant 11 : index
    %163 = memref.load %arg2[%c11] : memref<16xf32, #tpu.memory_space<smem>>
    %164 = vector.broadcast %163 : f32 to vector<1x128xf32>
    %165 = arith.mulf %164, %4 : vector<1x128xf32>
    %166 = arith.addf %162, %165 : vector<1x128xf32>
    %c8_47 = arith.constant 8 : index
    %167 = memref.load %arg2[%c8_47] : memref<16xf32, #tpu.memory_space<smem>>
    %168 = vector.broadcast %167 : f32 to vector<1x128xf32>
    %169 = arith.mulf %168, %1 : vector<1x128xf32>
    %c9_48 = arith.constant 9 : index
    %170 = memref.load %arg2[%c9_48] : memref<16xf32, #tpu.memory_space<smem>>
    %171 = vector.broadcast %170 : f32 to vector<1x128xf32>
    %172 = arith.mulf %171, %2 : vector<1x128xf32>
    %173 = arith.addf %169, %172 : vector<1x128xf32>
    %c10_49 = arith.constant 10 : index
    %174 = memref.load %arg2[%c10_49] : memref<16xf32, #tpu.memory_space<smem>>
    %175 = vector.broadcast %174 : f32 to vector<1x128xf32>
    %176 = arith.mulf %175, %4 : vector<1x128xf32>
    %177 = arith.addf %173, %176 : vector<1x128xf32>
    %c11_50 = arith.constant 11 : index
    %178 = memref.load %arg2[%c11_50] : memref<16xf32, #tpu.memory_space<smem>>
    %179 = vector.broadcast %178 : f32 to vector<1x128xf32>
    %180 = arith.mulf %179, %5 : vector<1x128xf32>
    %181 = arith.addf %177, %180 : vector<1x128xf32>
    %182 = arith.maximumf %166, %181 : vector<1x128xf32>
    %c8_51 = arith.constant 8 : index
    %183 = memref.load %arg2[%c8_51] : memref<16xf32, #tpu.memory_space<smem>>
    %184 = vector.broadcast %183 : f32 to vector<1x128xf32>
    %185 = arith.mulf %184, %3 : vector<1x128xf32>
    %c9_52 = arith.constant 9 : index
    %186 = memref.load %arg2[%c9_52] : memref<16xf32, #tpu.memory_space<smem>>
    %187 = vector.broadcast %186 : f32 to vector<1x128xf32>
    %188 = arith.mulf %187, %4 : vector<1x128xf32>
    %189 = arith.addf %185, %188 : vector<1x128xf32>
    %c10_53 = arith.constant 10 : index
    %190 = memref.load %arg2[%c10_53] : memref<16xf32, #tpu.memory_space<smem>>
    %191 = vector.broadcast %190 : f32 to vector<1x128xf32>
    %192 = arith.mulf %191, %6 : vector<1x128xf32>
    %193 = arith.addf %189, %192 : vector<1x128xf32>
    %c11_54 = arith.constant 11 : index
    %194 = memref.load %arg2[%c11_54] : memref<16xf32, #tpu.memory_space<smem>>
    %195 = vector.broadcast %194 : f32 to vector<1x128xf32>
    %196 = arith.mulf %195, %7 : vector<1x128xf32>
    %197 = arith.addf %193, %196 : vector<1x128xf32>
    %198 = arith.maximumf %182, %197 : vector<1x128xf32>
    %c8_55 = arith.constant 8 : index
    %199 = memref.load %arg2[%c8_55] : memref<16xf32, #tpu.memory_space<smem>>
    %200 = vector.broadcast %199 : f32 to vector<1x128xf32>
    %201 = arith.mulf %200, %4 : vector<1x128xf32>
    %c9_56 = arith.constant 9 : index
    %202 = memref.load %arg2[%c9_56] : memref<16xf32, #tpu.memory_space<smem>>
    %203 = vector.broadcast %202 : f32 to vector<1x128xf32>
    %204 = arith.mulf %203, %5 : vector<1x128xf32>
    %205 = arith.addf %201, %204 : vector<1x128xf32>
    %c10_57 = arith.constant 10 : index
    %206 = memref.load %arg2[%c10_57] : memref<16xf32, #tpu.memory_space<smem>>
    %207 = vector.broadcast %206 : f32 to vector<1x128xf32>
    %208 = arith.mulf %207, %7 : vector<1x128xf32>
    %209 = arith.addf %205, %208 : vector<1x128xf32>
    %c11_58 = arith.constant 11 : index
    %210 = memref.load %arg2[%c11_58] : memref<16xf32, #tpu.memory_space<smem>>
    %211 = vector.broadcast %210 : f32 to vector<1x128xf32>
    %212 = arith.mulf %211, %8 : vector<1x128xf32>
    %213 = arith.addf %209, %212 : vector<1x128xf32>
    %214 = arith.maximumf %198, %213 : vector<1x128xf32>
    %c2_59 = arith.constant 2 : index
    %215 = memref.load %arg3[%c2_59] : memref<4xf32, #tpu.memory_space<smem>>
    %216 = vector.broadcast %215 : f32 to vector<1x128xf32>
    %217 = arith.addf %214, %216 : vector<1x128xf32>
    %cst_60 = arith.constant 0.000000e+00 : f32
    %218 = vector.broadcast %cst_60 : f32 to vector<1x128xf32>
    %219 = arith.maximumf %217, %218 : vector<1x128xf32>
    %c2_61 = arith.constant 2 : index
    %220 = memref.load %arg4[%c2_61] : memref<4xf32, #tpu.memory_space<smem>>
    %221 = vector.broadcast %220 : f32 to vector<1x128xf32>
    %222 = arith.mulf %221, %219 : vector<1x128xf32>
    %223 = arith.addf %151, %222 : vector<1x128xf32>
    %c12 = arith.constant 12 : index
    %224 = memref.load %arg2[%c12] : memref<16xf32, #tpu.memory_space<smem>>
    %225 = vector.broadcast %224 : f32 to vector<1x128xf32>
    %226 = arith.mulf %225, %0 : vector<1x128xf32>
    %c13 = arith.constant 13 : index
    %227 = memref.load %arg2[%c13] : memref<16xf32, #tpu.memory_space<smem>>
    %228 = vector.broadcast %227 : f32 to vector<1x128xf32>
    %229 = arith.mulf %228, %1 : vector<1x128xf32>
    %230 = arith.addf %226, %229 : vector<1x128xf32>
    %c14 = arith.constant 14 : index
    %231 = memref.load %arg2[%c14] : memref<16xf32, #tpu.memory_space<smem>>
    %232 = vector.broadcast %231 : f32 to vector<1x128xf32>
    %233 = arith.mulf %232, %3 : vector<1x128xf32>
    %234 = arith.addf %230, %233 : vector<1x128xf32>
    %c15 = arith.constant 15 : index
    %235 = memref.load %arg2[%c15] : memref<16xf32, #tpu.memory_space<smem>>
    %236 = vector.broadcast %235 : f32 to vector<1x128xf32>
    %237 = arith.mulf %236, %4 : vector<1x128xf32>
    %238 = arith.addf %234, %237 : vector<1x128xf32>
    %c12_62 = arith.constant 12 : index
    %239 = memref.load %arg2[%c12_62] : memref<16xf32, #tpu.memory_space<smem>>
    %240 = vector.broadcast %239 : f32 to vector<1x128xf32>
    %241 = arith.mulf %240, %1 : vector<1x128xf32>
    %c13_63 = arith.constant 13 : index
    %242 = memref.load %arg2[%c13_63] : memref<16xf32, #tpu.memory_space<smem>>
    %243 = vector.broadcast %242 : f32 to vector<1x128xf32>
    %244 = arith.mulf %243, %2 : vector<1x128xf32>
    %245 = arith.addf %241, %244 : vector<1x128xf32>
    %c14_64 = arith.constant 14 : index
    %246 = memref.load %arg2[%c14_64] : memref<16xf32, #tpu.memory_space<smem>>
    %247 = vector.broadcast %246 : f32 to vector<1x128xf32>
    %248 = arith.mulf %247, %4 : vector<1x128xf32>
    %249 = arith.addf %245, %248 : vector<1x128xf32>
    %c15_65 = arith.constant 15 : index
    %250 = memref.load %arg2[%c15_65] : memref<16xf32, #tpu.memory_space<smem>>
    %251 = vector.broadcast %250 : f32 to vector<1x128xf32>
    %252 = arith.mulf %251, %5 : vector<1x128xf32>
    %253 = arith.addf %249, %252 : vector<1x128xf32>
    %254 = arith.maximumf %238, %253 : vector<1x128xf32>
    %c12_66 = arith.constant 12 : index
    %255 = memref.load %arg2[%c12_66] : memref<16xf32, #tpu.memory_space<smem>>
    %256 = vector.broadcast %255 : f32 to vector<1x128xf32>
    %257 = arith.mulf %256, %3 : vector<1x128xf32>
    %c13_67 = arith.constant 13 : index
    %258 = memref.load %arg2[%c13_67] : memref<16xf32, #tpu.memory_space<smem>>
    %259 = vector.broadcast %258 : f32 to vector<1x128xf32>
    %260 = arith.mulf %259, %4 : vector<1x128xf32>
    %261 = arith.addf %257, %260 : vector<1x128xf32>
    %c14_68 = arith.constant 14 : index
    %262 = memref.load %arg2[%c14_68] : memref<16xf32, #tpu.memory_space<smem>>
    %263 = vector.broadcast %262 : f32 to vector<1x128xf32>
    %264 = arith.mulf %263, %6 : vector<1x128xf32>
    %265 = arith.addf %261, %264 : vector<1x128xf32>
    %c15_69 = arith.constant 15 : index
    %266 = memref.load %arg2[%c15_69] : memref<16xf32, #tpu.memory_space<smem>>
    %267 = vector.broadcast %266 : f32 to vector<1x128xf32>
    %268 = arith.mulf %267, %7 : vector<1x128xf32>
    %269 = arith.addf %265, %268 : vector<1x128xf32>
    %270 = arith.maximumf %254, %269 : vector<1x128xf32>
    %c12_70 = arith.constant 12 : index
    %271 = memref.load %arg2[%c12_70] : memref<16xf32, #tpu.memory_space<smem>>
    %272 = vector.broadcast %271 : f32 to vector<1x128xf32>
    %273 = arith.mulf %272, %4 : vector<1x128xf32>
    %c13_71 = arith.constant 13 : index
    %274 = memref.load %arg2[%c13_71] : memref<16xf32, #tpu.memory_space<smem>>
    %275 = vector.broadcast %274 : f32 to vector<1x128xf32>
    %276 = arith.mulf %275, %5 : vector<1x128xf32>
    %277 = arith.addf %273, %276 : vector<1x128xf32>
    %c14_72 = arith.constant 14 : index
    %278 = memref.load %arg2[%c14_72] : memref<16xf32, #tpu.memory_space<smem>>
    %279 = vector.broadcast %278 : f32 to vector<1x128xf32>
    %280 = arith.mulf %279, %7 : vector<1x128xf32>
    %281 = arith.addf %277, %280 : vector<1x128xf32>
    %c15_73 = arith.constant 15 : index
    %282 = memref.load %arg2[%c15_73] : memref<16xf32, #tpu.memory_space<smem>>
    %283 = vector.broadcast %282 : f32 to vector<1x128xf32>
    %284 = arith.mulf %283, %8 : vector<1x128xf32>
    %285 = arith.addf %281, %284 : vector<1x128xf32>
    %286 = arith.maximumf %270, %285 : vector<1x128xf32>
    %c3_74 = arith.constant 3 : index
    %287 = memref.load %arg3[%c3_74] : memref<4xf32, #tpu.memory_space<smem>>
    %288 = vector.broadcast %287 : f32 to vector<1x128xf32>
    %289 = arith.addf %286, %288 : vector<1x128xf32>
    %cst_75 = arith.constant 0.000000e+00 : f32
    %290 = vector.broadcast %cst_75 : f32 to vector<1x128xf32>
    %291 = arith.maximumf %289, %290 : vector<1x128xf32>
    %c3_76 = arith.constant 3 : index
    %292 = memref.load %arg4[%c3_76] : memref<4xf32, #tpu.memory_space<smem>>
    %293 = vector.broadcast %292 : f32 to vector<1x128xf32>
    %294 = arith.mulf %293, %291 : vector<1x128xf32>
    %295 = arith.addf %223, %294 : vector<1x128xf32>
    %c0_77 = arith.constant 0 : index
    %296 = memref.load %arg5[%c0_77] : memref<1xf32, #tpu.memory_space<smem>>
    %297 = vector.broadcast %296 : f32 to vector<1x128xf32>
    %298 = arith.addf %295, %297 : vector<1x128xf32>
    %c0_78 = arith.constant 0 : index
    %c0_79 = arith.constant 0 : index
    %299 = vector.load %arg6[%c0_78, %c0_79] : memref<1x128xf32, #tpu.memory_space<vmem>>, vector<1x128xf32>
    tpu.vector_store %arg6[%c0_78, %c0_79], %298 {strides = array<i32>} : memref<1x128xf32, #tpu.memory_space<vmem>>, vector<1x128xf32>,
    return
  }
  func.func @transform_0(%arg0: i32) -> (i32, i32) {
    %c0_i32 = arith.constant 0 : i32
    %c0_i32_0 = arith.constant 0 : i32
    return %c0_i32, %arg0 : i32, i32
  }
  func.func @transform_1(%arg0: i32) -> i32 {
    %c0_i32 = arith.constant 0 : i32
    %c0_i32_0 = arith.constant 0 : i32
    return %c0_i32 : i32
  }
  func.func @transform_2(%arg0: i32) -> i32 {
    %c0_i32 = arith.constant 0 : i32
    %c0_i32_0 = arith.constant 0 : i32
    return %c0_i32 : i32
  }
  func.func @transform_3(%arg0: i32) -> i32 {
    %c0_i32 = arith.constant 0 : i32
    %c0_i32_0 = arith.constant 0 : i32
    return %c0_i32 : i32
  }
  func.func @transform_4(%arg0: i32) -> i32 {
    %c0_i32 = arith.constant 0 : i32
    %c0_i32_0 = arith.constant 0 : i32
    return %c0_i32 : i32
  }
  func.func @transform_5(%arg0: i32) -> (i32, i32) {
    %c0_i32 = arith.constant 0 : i32
    %c0_i32_0 = arith.constant 0 : i32
    return %c0_i32, %arg0 : i32, i32
  }
}

</mosaic_0001>

<llo_original>
// kernel: tpu_custom_call.1
$region0: #{tpu_custom_call.1}
  #allocation0 [shape = 'u32[]', space=smem, size = 0x4, offset = 0x4, fixed_abs, tag = 'smem constant byte address 0x4 - core index']
  #allocation1 [shape = 'u32[72,128]{1,0:T(1,128)}', space=vmem, size = 0x9000, scoped, tag = 'internal scratch']
  #allocation2 [shape = 'f32[1]{0:T(128)S(6)}', space=smem, size = 0x200, scoped, tag = 'scoped memory for tpu_custom_call.1']
  %s0 = inlined_call_operand.hbm [shape: f32[9,128], index: 0, kind: input, shape index: {}]
  %s1 = inlined_call_operand.vmem [shape: f32[16], index: 1, kind: input, shape index: {}]
  %s2 = inlined_call_operand.vmem [shape: f32[4], index: 2, kind: input, shape index: {}]
  %s3 = inlined_call_operand.vmem [shape: f32[4], index: 3, kind: input, shape index: {}]
  %s4 = inlined_call_operand.<no memory space> [shape: f32[1], index: 4, kind: input, shape index: {}]
  %s5 = inlined_call_operand.hbm [shape: f32[1,128], index: 5, kind: output, shape index: {}]
  %s6 = sld [smem:[#allocation0]]
  $region46: #{tpu_custom_call.1} parent=0
    _
  %s8 = ssub.s32 1, %s6
  %s9 = scalar_select 0, %s8, %s6
  %10 = sst [smem:[#allocation2]] %s4
  $region1: #{tpu_custom_call.1} parent=0
    #allocation3 [shape = 'u8[8192]{0}', space=vmem, size = 0x2000, scoped, tag = 'input window, operand 0, single buffered']
    #allocation4 [shape = 's32[1]{0}', space=sflag, size = 0x4, scoped, tag = 'scoped memory for tpu_custom_call.1']
    #allocation5 [shape = 's32[1]{0}', space=sflag, size = 0x4, scoped, tag = 'scoped memory for tpu_custom_call.1']
    #allocation6 [shape = 's32[1]{0}', space=sflag, size = 0x4, scoped, tag = 'scoped memory for tpu_custom_call.1']
    #allocation7 [shape = 'u8[512]{0}', space=smem, size = 0x200, scoped, tag = 'input window, operand 1, single buffered']
    #allocation8 [shape = 'u8[512]{0}', space=smem, size = 0x200, scoped, tag = 'input window, operand 2, single buffered']
    #allocation9 [shape = 's32[1]{0}', space=sflag, size = 0x4, scoped, tag = 'scoped memory for tpu_custom_call.1']
    #allocation10 [shape = 'u8[512]{0}', space=smem, size = 0x200, scoped, tag = 'input window, operand 3, single buffered']
    #allocation11 [shape = 'u8[512]{0}', space=vmem, size = 0x400, scoped, tag = 'output window, operand 0, single buffered']
    %11 = vsyncpa [#allocation4], 0
    %12 = vsyncpa [#allocation6], 0
    %13 = vsyncpa [#allocation9], 0
    %14 = vsyncpa [#allocation5], 0
    // Predicated region
    $region2: #{tpu_custom_call.1} parent=1 // pred_check
      _
    $region3: #{tpu_custom_call.1} parent=1 // pred_check_branch
      %16 = sbr.rel (0) target = $region5
    $region4: #{tpu_custom_call.1} parent=1 // pred_region
      %18 = vsyncadd [#allocation4], 0
      %s19 = sshll.u32 %s0, 4
      %s20 = int_to_ptr.hbm [resolvable:$true] %s19
      %s21 = sshll.u32 [#allocation3], 4
      %s22 = int_to_ptr.vmem [resolvable:$true] %s21
      %27 = dma.hbm_to_vmem [thread:$0]  %s20, 256, %s22, [#allocation4], 128, 128, 8
    $region5: #{tpu_custom_call.1} parent=1 // pred_fallthru
      _
    // Predicated region
    $region6: #{tpu_custom_call.1} parent=1 // pred_check
      _
    $region7: #{tpu_custom_call.1} parent=1 // pred_check_branch
      %29 = sbr.rel (0) target = $region9
    $region8: #{tpu_custom_call.1} parent=1 // pred_region
      %31 = vsyncadd [#allocation6], 0
      %s33 = sshll.u32 %s1, 4
      %s34 = int_to_ptr.vmem [resolvable:$true] %s33
      %36 = dma.vmem_to_smem %s34, 16, [#allocation7], [#allocation6]
    $region9: #{tpu_custom_call.1} parent=1 // pred_fallthru
      _
    // Predicated region
    $region10: #{tpu_custom_call.1} parent=1 // pred_check
      _
    $region11: #{tpu_custom_call.1} parent=1 // pred_check_branch
      %38 = sbr.rel (0) target = $region13
    $region12: #{tpu_custom_call.1} parent=1 // pred_region
      %40 = vsyncadd [#allocation9], 0
      %s42 = sshll.u32 %s2, 4
      %s43 = int_to_ptr.vmem [resolvable:$true] %s42
      %45 = dma.vmem_to_smem %s43, 16, [#allocation8], [#allocation9]
    $region13: #{tpu_custom_call.1} parent=1 // pred_fallthru
      _
    // Predicated region
    $region14: #{tpu_custom_call.1} parent=1 // pred_check
      _
    $region15: #{tpu_custom_call.1} parent=1 // pred_check_branch
      %47 = sbr.rel (0) target = $region17
    $region16: #{tpu_custom_call.1} parent=1 // pred_region
      %49 = vsyncadd [#allocation9], 0
      %s51 = sshll.u32 %s3, 4
      %s52 = int_to_ptr.vmem [resolvable:$true] %s51
      %54 = dma.vmem_to_smem %s52, 16, [#allocation10], [#allocation9]
    $region17: #{tpu_custom_call.1} parent=1 // pred_fallthru
      _
    // Predicated region
    $region18: #{tpu_custom_call.1} parent=1 // pred_check
      _
    $region19: #{tpu_custom_call.1} parent=1 // pred_check_branch
      %56 = sbr.rel (0) target = $region21
    $region20: #{tpu_custom_call.1} parent=1 // pred_region
      _
    $region21: #{tpu_custom_call.1} parent=1 // pred_fallthru
      _
    // Predicated region
    $region22: #{tpu_custom_call.1} parent=1 // pred_check
      _
    $region23: #{tpu_custom_call.1} parent=1 // pred_check_branch
      %58 = sbr.rel (0) target = $region25
    $region24: #{tpu_custom_call.1} parent=1 // pred_region
      %60 = dma.done [#allocation4], 256
    $region25: #{tpu_custom_call.1} parent=1 // pred_fallthru
      _
    // Predicated region
    $region26: #{tpu_custom_call.1} parent=1 // pred_check
      _
    $region27: #{tpu_custom_call.1} parent=1 // pred_check_branch
      %62 = sbr.rel (0) target = $region29
    $region28: #{tpu_custom_call.1} parent=1 // pred_region
      %64 = dma.done [#allocation6], 16
    $region29: #{tpu_custom_call.1} parent=1 // pred_fallthru
      _
    // Predicated region
    $region30: #{tpu_custom_call.1} parent=1 // pred_check
      _
    $region31: #{tpu_custom_call.1} parent=1 // pred_check_branch
      %66 = sbr.rel (0) target = $region33
    $region32: #{tpu_custom_call.1} parent=1 // pred_region
      %68 = dma.done [#allocation9], 16
    $region33: #{tpu_custom_call.1} parent=1 // pred_fallthru
      _
    // Predicated region
    $region34: #{tpu_custom_call.1} parent=1 // pred_check
      _
    $region35: #{tpu_custom_call.1} parent=1 // pred_check_branch
      %70 = sbr.rel (0) target = $region37
    $region36: #{tpu_custom_call.1} parent=1 // pred_region
      %72 = dma.done [#allocation9], 16
    $region37: #{tpu_custom_call.1} parent=1 // pred_fallthru
      _
    %73 = sfence
    %v74 = vld [vmem:[#allocation3] sm:$0x1]
    %v75 = vld [vmem:[#allocation3 + $0x1] sm:$0x1]
    %v76 = vld [vmem:[#allocation3 + $0x2] sm:$0x1]
    %v77 = vld [vmem:[#allocation3 + $0x3] sm:$0x1]
    %v78 = vld [vmem:[#allocation3 + $0x4] sm:$0x1]
    %v79 = vld [vmem:[#allocation3 + $0x5] sm:$0x1]
    %v80 = vld [vmem:[#allocation3 + $0x6] sm:$0x1]
    %v81 = vld [vmem:[#allocation3 + $0x7] sm:$0x1]
    %v82 = vld [vmem:[#allocation3 + $0x8] sm:$0x1]
    %s83 = sld [smem:[#allocation7]]
    %v84 = vstv %s83
    %v85 = vmul.f32 %v84, %v74
    %s86 = sld [smem:[#allocation7 + $0x1]]
    %v87 = vstv %s86
    %v88 = vmul.f32 %v87, %v75
    %v89 = vadd.f32 %v85, %v88
    %s90 = sld [smem:[#allocation7 + $0x2]]
    %v91 = vstv %s90
    %v92 = vmul.f32 %v91, %v77
    %v93 = vadd.f32 %v89, %v92
    %s94 = sld [smem:[#allocation7 + $0x3]]
    %v95 = vstv %s94
    %v96 = vmul.f32 %v95, %v78
    %v97 = vadd.f32 %v93, %v96
    %v98 = vmul.f32 %v84, %v75
    %v99 = vmul.f32 %v87, %v76
    %v100 = vadd.f32 %v98, %v99
    %v101 = vmul.f32 %v91, %v78
    %v102 = vadd.f32 %v100, %v101
    %v103 = vmul.f32 %v95, %v79
    %v104 = vadd.f32 %v102, %v103
    %v105 = vmax.f32 %v97, %v104
    %v106 = vmul.f32 %v84, %v77
    %v107 = vmul.f32 %v87, %v78
    %v108 = vadd.f32 %v106, %v107
    %v109 = vmul.f32 %v91, %v80
    %v110 = vadd.f32 %v108, %v109
    %v111 = vmul.f32 %v95, %v81
    %v112 = vadd.f32 %v110, %v111
    %v113 = vmax.f32 %v105, %v112
    %v114 = vmul.f32 %v84, %v78
    %v115 = vmul.f32 %v87, %v79
    %v116 = vadd.f32 %v114, %v115
    %v117 = vmul.f32 %v91, %v81
    %v118 = vadd.f32 %v116, %v117
    %v119 = vmul.f32 %v95, %v82
    %v120 = vadd.f32 %v118, %v119
    %v121 = vmax.f32 %v113, %v120
    %s122 = sld [smem:[#allocation8]]
    %v123 = vstv %s122
    %v124 = vadd.f32 %v121, %v123
    %v125 = vmax.f32 %v124, 0.0
    %s126 = sld [smem:[#allocation10]]
    %v127 = vstv %s126
    %v128 = vmul.f32 %v127, %v125
    %s129 = sld [smem:[#allocation7 + $0x4]]
    %v130 = vstv %s129
    %v131 = vmul.f32 %v130, %v74
    %s132 = sld [smem:[#allocation7 + $0x5]]
    %v133 = vstv %s132
    %v134 = vmul.f32 %v133, %v75
    %v135 = vadd.f32 %v131, %v134
    %s136 = sld [smem:[#allocation7 + $0x6]]
    %v137 = vstv %s136
    %v138 = vmul.f32 %v137, %v77
    %v139 = vadd.f32 %v135, %v138
    %s140 = sld [smem:[#allocation7 + $0x7]]
    %v141 = vstv %s140
    %v142 = vmul.f32 %v141, %v78
    %v143 = vadd.f32 %v139, %v142
    %v144 = vmul.f32 %v130, %v75
    %v145 = vmul.f32 %v133, %v76
    %v146 = vadd.f32 %v144, %v145
    %v147 = vmul.f32 %v137, %v78
    %v148 = vadd.f32 %v146, %v147
    %v149 = vmul.f32 %v141, %v79
    %v150 = vadd.f32 %v148, %v149
    %v151 = vmax.f32 %v143, %v150
    %v152 = vmul.f32 %v130, %v77
    %v153 = vmul.f32 %v133, %v78
    %v154 = vadd.f32 %v152, %v153
    %v155 = vmul.f32 %v137, %v80
    %v156 = vadd.f32 %v154, %v155
    %v157 = vmul.f32 %v141, %v81
    %v158 = vadd.f32 %v156, %v157
    %v159 = vmax.f32 %v151, %v158
    %v160 = vmul.f32 %v130, %v78
    %v161 = vmul.f32 %v133, %v79
    %v162 = vadd.f32 %v160, %v161
    %v163 = vmul.f32 %v137, %v81
    %v164 = vadd.f32 %v162, %v163
    %v165 = vmul.f32 %v141, %v82
    %v166 = vadd.f32 %v164, %v165
    %v167 = vmax.f32 %v159, %v166
    %s168 = sld [smem:[#allocation8 + $0x1]]
    %v169 = vstv %s168
    %v170 = vadd.f32 %v167, %v169
    %v171 = vmax.f32 %v170, 0.0
    %s172 = sld [smem:[#allocation10 + $0x1]]
    %v173 = vstv %s172
    %v174 = vmul.f32 %v173, %v171
    %v175 = vadd.f32 %v128, %v174
    %s176 = sld [smem:[#allocation7 + $0x8]]
    %v177 = vstv %s176
    %v178 = vmul.f32 %v177, %v74
    %s179 = sld [smem:[#allocation7 + $0x9]]
    %v180 = vstv %s179
    %v181 = vmul.f32 %v180, %v75
    %v182 = vadd.f32 %v178, %v181
    %s183 = sld [smem:[#allocation7 + $0xa]]
    %v184 = vstv %s183
    %v185 = vmul.f32 %v184, %v77
    %v186 = vadd.f32 %v182, %v185
    %s187 = sld [smem:[#allocation7 + $0xb]]
    %v188 = vstv %s187
    %v189 = vmul.f32 %v188, %v78
    %v190 = vadd.f32 %v186, %v189
    %v191 = vmul.f32 %v177, %v75
    %v192 = vmul.f32 %v180, %v76
    %v193 = vadd.f32 %v191, %v192
    %v194 = vmul.f32 %v184, %v78
    %v195 = vadd.f32 %v193, %v194
    %v196 = vmul.f32 %v188, %v79
    %v197 = vadd.f32 %v195, %v196
    %v198 = vmax.f32 %v190, %v197
    %v199 = vmul.f32 %v177, %v77
    %v200 = vmul.f32 %v180, %v78
    %v201 = vadd.f32 %v199, %v200
    %v202 = vmul.f32 %v184, %v80
    %v203 = vadd.f32 %v201, %v202
    %v204 = vmul.f32 %v188, %v81
    %v205 = vadd.f32 %v203, %v204
    %v206 = vmax.f32 %v198, %v205
    %v207 = vmul.f32 %v177, %v78
    %v208 = vmul.f32 %v180, %v79
    %v209 = vadd.f32 %v207, %v208
    %v210 = vmul.f32 %v184, %v81
    %v211 = vadd.f32 %v209, %v210
    %v212 = vmul.f32 %v188, %v82
    %v213 = vadd.f32 %v211, %v212
    %v214 = vmax.f32 %v206, %v213
    %s215 = sld [smem:[#allocation8 + $0x2]]
    %v216 = vstv %s215
    %v217 = vadd.f32 %v214, %v216
    %v218 = vmax.f32 %v217, 0.0
    %s219 = sld [smem:[#allocation10 + $0x2]]
    %v220 = vstv %s219
    %v221 = vmul.f32 %v220, %v218
    %v222 = vadd.f32 %v175, %v221
    %s223 = sld [smem:[#allocation7 + $0xc]]
    %v224 = vstv %s223
    %v225 = vmul.f32 %v224, %v74
    %s226 = sld [smem:[#allocation7 + $0xd]]
    %v227 = vstv %s226
    %v228 = vmul.f32 %v227, %v75
    %v229 = vadd.f32 %v225, %v228
    %s230 = sld [smem:[#allocation7 + $0xe]]
    %v231 = vstv %s230
    %v232 = vmul.f32 %v231, %v77
    %v233 = vadd.f32 %v229, %v232
    %s234 = sld [smem:[#allocation7 + $0xf]]
    %v235 = vstv %s234
    %v236 = vmul.f32 %v235, %v78
    %v237 = vadd.f32 %v233, %v236
    %v238 = vmul.f32 %v224, %v75
    %v239 = vmul.f32 %v227, %v76
    %v240 = vadd.f32 %v238, %v239
    %v241 = vmul.f32 %v231, %v78
    %v242 = vadd.f32 %v240, %v241
    %v243 = vmul.f32 %v235, %v79
    %v244 = vadd.f32 %v242, %v243
    %v245 = vmax.f32 %v237, %v244
    %v246 = vmul.f32 %v224, %v77
    %v247 = vmul.f32 %v227, %v78
    %v248 = vadd.f32 %v246, %v247
    %v249 = vmul.f32 %v231, %v80
    %v250 = vadd.f32 %v248, %v249
    %v251 = vmul.f32 %v235, %v81
    %v252 = vadd.f32 %v250, %v251
    %v253 = vmax.f32 %v245, %v252
    %v254 = vmul.f32 %v224, %v78
    %v255 = vmul.f32 %v227, %v79
    %v256 = vadd.f32 %v254, %v255
    %v257 = vmul.f32 %v231, %v81
    %v258 = vadd.f32 %v256, %v257
    %v259 = vmul.f32 %v235, %v82
    %v260 = vadd.f32 %v258, %v259
    %v261 = vmax.f32 %v253, %v260
    %s262 = sld [smem:[#allocation8 + $0x3]]
    %v263 = vstv %s262
    %v264 = vadd.f32 %v261, %v263
    %v265 = vmax.f32 %v264, 0.0
    %s266 = sld [smem:[#allocation10 + $0x3]]
    %v267 = vstv %s266
    %v268 = vmul.f32 %v267, %v265
    %v269 = vadd.f32 %v222, %v268
    %s270 = sld [smem:[#allocation2]]
    %v271 = vstv %s270
    %v272 = vadd.f32 %v269, %v271
    %273 = vst [vmem:[#allocation11] sm:$0x1] %v272
    // Predicated region
    $region38: #{tpu_custom_call.1} parent=1 // pred_check
      _
    $region39: #{tpu_custom_call.1} parent=1 // pred_check_branch
      %275 = sbr.rel (0) target = $region41
    $region40: #{tpu_custom_call.1} parent=1 // pred_region
      %277 = vsyncadd [#allocation5], 0
      %s279 = sshll.u32 [#allocation11], 4
      %s280 = int_to_ptr.vmem [resolvable:$true] %s279
      %s281 = sshll.u32 %s5, 4
      %s282 = int_to_ptr.hbm [resolvable:$true] %s281
      %284 = dma.vmem_to_hbm [thread:$0]  %s280, 16, %s282, [#allocation5]
    $region41: #{tpu_custom_call.1} parent=1 // pred_fallthru
      _
    // Predicated region
    $region42: #{tpu_custom_call.1} parent=1 // pred_check
      _
    $region43: #{tpu_custom_call.1} parent=1 // pred_check_branch
      %286 = sbr.rel (0) target = $region45
    $region44: #{tpu_custom_call.1} parent=1 // pred_region
      %288 = dma.done [#allocation5], 16
    $region45: #{tpu_custom_call.1} parent=1 // pred_fallthru
      _
    %289 = vsyncpa [#allocation4], 1
    %290 = vsyncpa [#allocation5], 1
    %291 = vsyncpa [#allocation6], 1
    %292 = vsyncpa [#allocation9], 1

</llo_original>
